<compile_context>
chip_gen: v6e
topology: v6e:2x2x1
jax: 0.10.0
libtpu: 0.0.40
codegen_flags: <defaults>
</compile_context>

<pallas_src>
import jax
import jax.numpy as jnp
from jax.experimental import pallas as pl
from jax.experimental.pallas import tpu as pltpu


_VMEM_LIMIT_BYTES = 40 * 1024 * 1024   # explicit scoped-VMEM budget; safe on v5e/v6e/v7x
_DEFAULT_TILE_BYTES = 6 * 1024 * 1024  # per-buffer tile target -> ~24 MiB double-buffered


def _make_kernel(lane_block: int):
    """Kernel closed over the static lane-tile width (needed for the tile's
    global lane origin when the lane axis is split across the grid)."""

    def kernel(band_ref, x_ref, o_ref):
        # band_ref: SMEM scalar-prefetch (2,) int32 = [sx*W, (sx+rh)*W).
        # Hoist the tile origin into the scalar thresholds so the vector side
        # compares a raw (unshifted) iota -> no full-tile int32 add.
        off = pl.program_id(1) * lane_block
        lo = band_ref[0] - off
        hi = band_ref[1] - off
        # Column-granularity mask: all iota/compare/select work is (1, tl);
        # the multiply broadcasts it across sublanes (~1 VALU mul / element).
        col = jax.lax.broadcasted_iota(jnp.int32, (1, x_ref.shape[-1]), 1)
        inside = (col >= lo) & (col < hi)
        mask_row = jnp.where(inside,
                             jnp.asarray(1.0, x_ref.dtype),
                             jnp.asarray(1.5, x_ref.dtype))
        o_ref[...] = x_ref[...] * mask_row

    return kernel


def _round_down(v: int, q: int) -> int:
    return max((v // q) * q, q)


def _choose_tiles(rows: int, lanes: int, itemsize: int, max_tile_bytes: int):
    """Pick (row_tile, lane_tile).  Prefer the full lane axis in one tile; only
    split lanes for very large H*W, avoiding tail tiles narrower than 128."""
    sublane_q = max(8, 32 // itemsize)  # 8 fp32, 16 bf16, 32 int8
    if lanes * itemsize * sublane_q <= max_tile_bytes:
        tl = lanes
        max_tr = max_tile_bytes // (lanes * itemsize)
        tr = rows if rows <= max_tr else _round_down(min(max_tr, rows), sublane_q)
    else:
        tr = rows if rows <= sublane_q else sublane_q
        max_tl = max_tile_bytes // (tr * itemsize)
        tl = _round_down(min(max_tl, lanes), 128)
        # Avoid a trailing lane tile narrower than 128 lanes (masked vst.msk).
        while tl > 128 and 0 < (lanes % tl) < 128:
            tl -= 128
    return tr, tl


def waveblock(x: jax.Array, sx, *, training: bool = True,
              in_place: bool = False, max_tile_bytes: int | None = None) -> jax.Array:
    """Pallas implementation of Waveblock.forward.

    Args:
      x: (N, C, H, W) array.
      sx: int32 scalar band start row (equivalent of random.randint(0, h - rh)).
      training: if False, identity (matches PyTorch eval mode).
      in_place: alias the output onto x's buffer (use when the caller overwrites x).
      max_tile_bytes: optional per-buffer tile-size budget override (testing / tuning).
    """
    if not training:
        return x

    n, c, h, w = x.shape
    # Matches PyTorch's `round(0.3 * h)` exactly (same Python float + round()).
    rh = int(round(0.3 * h))

    rows, lanes = n * c, h * w           # lane-dense 2-D view (free for NCHW)
    x2 = x.reshape(rows, lanes)
    itemsize = x.dtype.itemsize

    tr, tl = _choose_tiles(rows, lanes, itemsize,
                           max_tile_bytes or _DEFAULT_TILE_BYTES)
    grid = (pl.cdiv(rows, tr), pl.cdiv(lanes, tl))

    # Band thresholds in flattened-column coordinates (no divide in-kernel).
    sx_i = jnp.asarray(sx, jnp.int32)
    band = jnp.stack([sx_i * w, (sx_i + rh) * w]).astype(jnp.int32)

    extra_kwargs = {}
    if in_place:
        # Operand indices include the scalar-prefetch arg: (band=0, x2=1) -> out 0.
        extra_kwargs["input_output_aliases"] = {1: 0}
        # TODO(synk): for the aliased path the band interior is an identity
        # (mask == 1.0); a manual pl.ANY + double-buffered DMA pipeline gated by
        # the prefetched band scalars could skip reading/writing those ~30% of
        # bytes (the only way past the 2*size HBM roofline). Not implemented.

    out2 = pl.pallas_call(
        _make_kernel(tl),
        out_shape=jax.ShapeDtypeStruct((rows, lanes), x.dtype),
        grid_spec=pltpu.PrefetchScalarGridSpec(
            num_scalar_prefetch=1,
            grid=grid,
            in_specs=[pl.BlockSpec((tr, tl), lambda i, j, band_ref: (i, j))],
            out_specs=pl.BlockSpec((tr, tl), lambda i, j, band_ref: (i, j)),
        ),
        compiler_params=pltpu.CompilerParams(
            # Every output block is independent -> both axes parallel (lets v7x
            # shard the grid across its 2 TensorCores).
            dimension_semantics=("parallel", "parallel"),
            vmem_limit_bytes=_VMEM_LIMIT_BYTES),
        cost_estimate=pl.CostEstimate(
            flops=x.size, transcendentals=0,
            bytes_accessed=2 * x.size * itemsize),
        **extra_kwargs,
    )(band, x2)

    return out2.reshape(x.shape)


def _reference(x, sx, rh):
    mask = jnp.full(x.shape, 1.5, dtype=x.dtype)
    mask = mask.at[:, :, sx:sx + rh, :].set(1.0)
    return x * mask


if __name__ == "__main__":
    key = jax.random.PRNGKey(0)
    kx, ks, kx2, ks2 = jax.random.split(key, 4)

    # 1) Primary small test (single-tile, full-lane path).
    N, C, H, W = 2, 4, 16, 16
    x = jax.random.normal(kx, (N, C, H, W), dtype=jnp.float32)
    rh = int(round(0.3 * H))
    # PyTorch: random.randint(0, h - rh) is inclusive of both endpoints.
    sx = int(jax.random.randint(ks, (), 0, H - rh + 1))

    out = jax.block_until_ready(waveblock(x, sx, training=True))
    ref = _reference(x, sx, rh)
    assert jnp.allclose(out, ref, atol=1e-6, rtol=1e-6), "mismatch vs reference"

    # 2) in_place (aliased output) path.
    out_ip = jax.block_until_ready(waveblock(x, sx, training=True, in_place=True))
    assert jnp.allclose(out_ip, ref, atol=1e-6, rtol=1e-6), "mismatch (in_place) vs reference"

    # 3) Eval mode is identity.
    out_eval = jax.block_until_ready(waveblock(x, sx, training=False))
    assert jnp.array_equal(out_eval, x)

    # 4) Larger map, full-lane tile (lanes = 1344).
    N2, C2, H2, W2 = 2, 16, 24, 56
    x2 = jax.random.normal(kx2, (N2, C2, H2, W2), dtype=jnp.float32)
    rh2 = int(round(0.3 * H2))
    sx2 = int(jax.random.randint(ks2, (), 0, H2 - rh2 + 1))
    out2 = jax.block_until_ready(waveblock(x2, sx2, training=True))
    ref2 = _reference(x2, sx2, rh2)
    assert jnp.allclose(out2, ref2, atol=1e-6, rtol=1e-6), "mismatch (full-lane) vs reference"

    # 5) Force lane-axis splitting (tiny tile budget) to exercise the
    #    program_id(1) threshold offset and the non-divisible lane tail.
    out2s = jax.block_until_ready(
        waveblock(x2, sx2, training=True, max_tile_bytes=16 * 1024))
    assert jnp.allclose(out2s, ref2, atol=1e-6, rtol=1e-6), "mismatch (split-lane) vs reference"

    # 6) bf16 coverage (sublane quantum 16, exact 1.0 / 1.5 constants).
    xb = x.astype(jnp.bfloat16)
    outb = jax.block_until_ready(waveblock(xb, sx, training=True))
    refb = _reference(xb, sx, rh)
    assert jnp.allclose(outb.astype(jnp.float32), refb.astype(jnp.float32),
                        atol=1e-2, rtol=1e-2), "mismatch (bf16) vs reference"

    print("KERNEL_OK")
</pallas_src>

<mosaic_0001>
module attributes {stable_mosaic.version = 11 : i64} {
  func.func @kernel(%arg0: i32, %arg1: i32, %arg2: memref<2xi32, #tpu.memory_space<smem>>, %arg3: memref<8x256xf32, #tpu.memory_space<vmem>>, %arg4: memref<8x256xf32, #tpu.memory_space<vmem>>) attributes {dimension_semantics = [#tpu.dimension_semantics<parallel>, #tpu.dimension_semantics<parallel>], iteration_bounds = array<i64: 1, 1>, scalar_prefetch = 1 : i64, scratch_operands = 0 : i64, tpu.core_type = #tpu.core_type<tc>, window_params = [{transform_indices = @transform_0, window_bounds = array<i64: 8, 256>}, {transform_indices = @transform_1, window_bounds = array<i64: 8, 256>}]} {
    %c256_i32 = arith.constant 256 : i32
    %0 = arith.muli %arg1, %c256_i32 : i32
    %c0 = arith.constant 0 : index
    %1 = memref.load %arg2[%c0] : memref<2xi32, #tpu.memory_space<smem>>
    %2 = arith.subi %1, %0 : i32
    %c1 = arith.constant 1 : index
    %3 = memref.load %arg2[%c1] : memref<2xi32, #tpu.memory_space<smem>>
    %4 = arith.subi %3, %0 : i32
    %5 = tpu.iota {dimensions = array<i32: 1>} : vector<1x256xi32>
    %6 = vector.broadcast %2 : i32 to vector<1x256xi32>
    %7 = arith.cmpi sge, %5, %6 : vector<1x256xi32>
    %8 = vector.broadcast %4 : i32 to vector<1x256xi32>
    %9 = arith.cmpi slt, %5, %8 : vector<1x256xi32>
    %10 = arith.andi %7, %9 : vector<1x256xi1>
    %cst = arith.constant 1.000000e+00 : f32
    %cst_0 = arith.constant 1.500000e+00 : f32
    %11 = vector.broadcast %cst : f32 to vector<1x256xf32>
    %12 = vector.broadcast %cst_0 : f32 to vector<1x256xf32>
    %13 = arith.select %10, %11, %12 : vector<1x256xi1>, vector<1x256xf32>
    %c0_1 = arith.constant 0 : index
    %c0_2 = arith.constant 0 : index
    %14 = vector.load %arg3[%c0_1, %c0_2] : memref<8x256xf32, #tpu.memory_space<vmem>>, vector<8x256xf32>
    %15 = vector.broadcast %13 : vector<1x256xf32> to vector<8x256xf32>
    %16 = arith.mulf %14, %15 : vector<8x256xf32>
    %c0_3 = arith.constant 0 : index
    %c0_4 = arith.constant 0 : index
    %17 = vector.load %arg4[%c0_3, %c0_4] : memref<8x256xf32, #tpu.memory_space<vmem>>, vector<8x256xf32>
    tpu.vector_store %arg4[%c0_3, %c0_4], %16 {strides = array<i32>} : memref<8x256xf32, #tpu.memory_space<vmem>>, vector<8x256xf32>,
    return
  }
  func.func @transform_0(%arg0: i32, %arg1: i32, %arg2: memref<2xi32, #tpu.memory_space<smem>>) -> (i32, i32) {
    %c0_i32 = arith.constant 0 : i32
    return %arg0, %arg1 : i32, i32
  }
  func.func @transform_1(%arg0: i32, %arg1: i32, %arg2: memref<2xi32, #tpu.memory_space<smem>>) -> (i32, i32) {
    %c0_i32 = arith.constant 0 : i32
    return %arg0, %arg1 : i32, i32
  }
}

</mosaic_0001>

<llo_original>
// kernel: tpu_custom_call.1
$region0: #{tpu_custom_call.1}
  #allocation0 [shape = 'u32[]', space=smem, size = 0x4, offset = 0x4, fixed_abs, tag = 'smem constant byte address 0x4 - core index']
  #allocation1 [shape = 'u32[144,128]{1,0:T(1,128)}', space=vmem, size = 0x12000, scoped, tag = 'internal scratch']
  #allocation2 [shape = 's32[1]{0}', space=sflag, size = 0x4, scoped, tag = 'scoped memory for tpu_custom_call.1']
  #allocation3 [shape = 'u8[512]{0}', space=smem, size = 0x200, scoped, tag = 'prefetched SMEM operand 0']
  %s0 = inlined_call_operand.hbm [shape: s32[2], index: 0, kind: input, shape index: {}]
  %s1 = inlined_call_operand.hbm [shape: f32[8,256], index: 1, kind: input, shape index: {}]
  %s2 = inlined_call_operand.hbm [shape: f32[8,256], index: 2, kind: output, shape index: {}]
  %s3 = sld [smem:[#allocation0]]
  $region18: #{tpu_custom_call.1} parent=0
    _
  %s5 = ssub.s32 1, %s3
  %s6 = scalar_select 0, %s5, %s3
  %8 = dma.hbm_to_smem %s0, 16, [#allocation3], [#allocation2]
  %9 = dma.done [#allocation2], 16
  %10 = sfence
  $region1: #{tpu_custom_call.1} parent=0
    #allocation4 [shape = 'u8[8192]{0}', space=vmem, size = 0x2000, scoped, tag = 'input window, operand 1, single buffered']
    #allocation5 [shape = 's32[1]{0}', space=sflag, size = 0x4, scoped, tag = 'scoped memory for tpu_custom_call.1']
    #allocation6 [shape = 's32[1]{0}', space=sflag, size = 0x4, scoped, tag = 'scoped memory for tpu_custom_call.1']
    #allocation7 [shape = 'u8[8192]{0}', space=vmem, size = 0x2000, scoped, tag = 'output window, operand 0, single buffered']
    %11 = vsyncpa [#allocation5], 0
    %12 = vsyncpa [#allocation6], 0
    // Predicated region
    $region2: #{tpu_custom_call.1} parent=1 // pred_check
      _
    $region3: #{tpu_custom_call.1} parent=1 // pred_check_branch
      %14 = sbr.rel (0) target = $region5
    $region4: #{tpu_custom_call.1} parent=1 // pred_region
      %s16 = ssub.s32 256, 256
      %17 = vsyncadd [#allocation5], %s16
      %s19 = sshll.u32 [#allocation4], 4
      %s20 = int_to_ptr.vmem [resolvable:$true] %s19
      %22 = dma.hbm_to_vmem [thread:$0]  %s1, 256, %s20, [#allocation5]
    $region5: #{tpu_custom_call.1} parent=1 // pred_fallthru
      _
    // Predicated region
    $region6: #{tpu_custom_call.1} parent=1 // pred_check
      _
    $region7: #{tpu_custom_call.1} parent=1 // pred_check_branch
      %24 = sbr.rel (0) target = $region9
    $region8: #{tpu_custom_call.1} parent=1 // pred_region
      %25 = dma.done [#allocation5], 256
    $region9: #{tpu_custom_call.1} parent=1 // pred_fallthru
      _
    %s26 = smul.u32 0, 256
    %s27 = sld [smem:[#allocation3]]
    %s28 = ssub.s32 %s27, %s26
    %s29 = sld [smem:[#allocation3 + $0x1]]
    %s30 = ssub.s32 %s29, %s26
    %v31 = vlaneseq
    %v32 = vand.u32 %v31, 127
    %v33 = vadd.s32 %v32, 128
    %v34 = vstv %s28
    %vm35 = vcmp.ge.s32.totalorder %v32, %v34
    %vm36 = vcmp.ge.s32.totalorder %v33, %v34
    %v37 = vstv %s30
    %vm38 = vcmp.lt.s32.totalorder %v32, %v37
    %vm39 = vcmp.lt.s32.totalorder %v33, %v37
    %vm40 = vmand %vm35, %vm38
    %vm41 = vmand %vm36, %vm39
    %v42 = vsel %vm40, 1.0, 1.5
    %v43 = vsel %vm41, 1.0, 1.5
    %v44 = vld [vmem:[#allocation4] sm:$0xff]
    %v45 = vld [vmem:[#allocation4 + $0x8] sm:$0xff]
    %v46 = vmul.f32 %v44, %v42
    %v47 = vmul.f32 %v45, %v43
    %48 = vst [vmem:[#allocation7] sm:$0xff] %v46
    %49 = vst [vmem:[#allocation7 + $0x8] sm:$0xff] %v47
    // Predicated region
    $region10: #{tpu_custom_call.1} parent=1 // pred_check
      _
    $region11: #{tpu_custom_call.1} parent=1 // pred_check_branch
      %51 = sbr.rel (0) target = $region13
    $region12: #{tpu_custom_call.1} parent=1 // pred_region
      %s53 = ssub.s32 256, 256
      %54 = vsyncadd [#allocation6], %s53
      %s56 = sshll.u32 [#allocation7], 4
      %s57 = int_to_ptr.vmem [resolvable:$true] %s56
      %59 = dma.vmem_to_hbm [thread:$0]  %s57, 256, %s2, [#allocation6]
    $region13: #{tpu_custom_call.1} parent=1 // pred_fallthru
      _
    // Predicated region
    $region14: #{tpu_custom_call.1} parent=1 // pred_check
      _
    $region15: #{tpu_custom_call.1} parent=1 // pred_check_branch
      %61 = sbr.rel (0) target = $region17
    $region16: #{tpu_custom_call.1} parent=1 // pred_region
      %62 = dma.done [#allocation6], 256
    $region17: #{tpu_custom_call.1} parent=1 // pred_fallthru
      _
    %63 = vsyncpa [#allocation5], 1
    %64 = vsyncpa [#allocation6], 1

</llo_original>
